<compile_context>
chip_gen: v6e
topology: v6e:2x2x1
jax: 0.10.0
libtpu: 0.0.40
codegen_flags: <defaults>
</compile_context>

<pallas_src>
import functools

import jax
import jax.numpy as jnp
import numpy as np
from jax.experimental import pallas as pl
from jax.experimental.pallas import tpu as pltpu

BETA = 0.001
BIAS = -0.17
LAYERS = (0, 1, 2, 3, 4, 5)
GAMMAS = (0.0002, 0.0002, 0.0002, 0.0002, 0.0002, 0.0002)

_LANES = 128


def _generator_loss_kernel(tgt_ref,           # SMEM (B,) int32 (scalar prefetch)
                           sattn_ref,         # VMEM (L, ac, 128) streamed chunk
                           pattn_ref,         # VMEM (ac, 128)    streamed chunk
                           logits_ref,        # VMEM (B, C)       constant block
                           img0_ref,          # VMEM (ic, 128)    streamed chunk
                           img1_ref,          # VMEM (ic, 128)    streamed chunk
                           out_ref,           # VMEM (1, 1) f32
                           mse_acc,           # VMEM (8, 128) f32 scratch
                           misd_acc,          # VMEM (L, 8, 128) f32 scratch
                           *, beta, bias, gammas, n_img_elem,
                           img_rows, n_img_chunks,
                           attn_rows, n_attn_chunks):
    i = pl.program_id(0)
    n_layers = sattn_ref.shape[0]

    @pl.when(i == 0)
    def _init():
        mse_acc[...] = jnp.zeros_like(mse_acc)
        misd_acc[...] = jnp.zeros_like(misd_acc)

    # ---- streamed MSE partial sums (VALU-only accumulation) ---------------
    @pl.when(i < n_img_chunks)
    def _mse_step():
        ic = img0_ref.shape[0]
        d = img0_ref[...].astype(jnp.float32) - img1_ref[...].astype(jnp.float32)
        d2 = d * d
        # Mask rows of the (possibly overhanging) final chunk.
        row = jax.lax.broadcasted_iota(jnp.int32, d2.shape, 0) + i * ic
        d2 = jnp.where(row < img_rows, d2, 0.0)
        if ic % 8 == 0:
            mse_acc[...] += jnp.sum(d2.reshape(ic // 8, 8, _LANES), axis=0)
        else:  # single small block (chunk == full, not 8-aligned): one XLU reduce
            mse_acc[0:1, :] += jnp.sum(d2, axis=0, keepdims=True)

    # ---- streamed misdirection partial sums -------------------------------
    @pl.when(i < n_attn_chunks)
    def _attn_step():
        ac = pattn_ref.shape[0]
        pf = (1.0 + bias) - pattn_ref[...].astype(jnp.float32)       # (ac, 128)
        row = jax.lax.broadcasted_iota(jnp.int32, pf.shape, 0) + i * ac
        valid = row < attn_rows
        for l in range(n_layers):                                    # static unroll
            prod = sattn_ref[l].astype(jnp.float32) * pf
            prod = jnp.where(valid, prod, 0.0)
            if ac % 8 == 0:
                misd_acc[l] += jnp.sum(prod.reshape(ac // 8, 8, _LANES), axis=0)
            else:
                misd_acc[l, 0:1, :] += jnp.sum(prod, axis=0, keepdims=True)

    # ---- finalize: single reductions, log/gamma, cross-entropy, combine ----
    @pl.when(i == pl.num_programs(0) - 1)
    def _finalize():
        def _reduce_11(x):                     # (8, 128) -> (1, 1)
            return jnp.sum(jnp.sum(x, axis=1, keepdims=True), axis=0, keepdims=True)

        mse = _reduce_11(mse_acc[...]) * (1.0 / n_img_elem)

        lm = jnp.zeros((1, 1), jnp.float32)
        for l in range(n_layers):
            tot = _reduce_11(misd_acc[l])
            lm = lm + gammas[l] * jnp.log(jnp.maximum(tot, 1.0))     # clamp <=1 -> 1

        # Cross-entropy (mean over batch, raw logits, SMEM int targets).
        logits = logits_ref[...].astype(jnp.float32)                 # (B, C)
        bsz, ncls = logits.shape
        m = jnp.max(logits, axis=-1, keepdims=True)
        lse = m + jnp.log(jnp.sum(jnp.exp(logits - m), axis=-1, keepdims=True))
        rows = jax.lax.broadcasted_iota(jnp.int32, (bsz, 1), 0)
        tgt_vec = jnp.zeros((bsz, 1), jnp.int32)
        for b in range(bsz):                       # static unroll, VALU selects only
            tgt_vec = jnp.where(rows == b, tgt_ref[b], tgt_vec)
        cols = jax.lax.broadcasted_iota(jnp.int32, (bsz, ncls), 1)
        tgt_logit = jnp.sum(jnp.where(cols == tgt_vec, logits, 0.0),
                            axis=-1, keepdims=True)                  # (B, 1)
        ce = jnp.sum(lse - tgt_logit, axis=0, keepdims=True) * (1.0 / bsz)

        out_ref[...] = mse + lm - beta * ce


def _pick_chunk(rows, desired):
    """Chunk rows for a (rows, 128) array: whole array if it fits the desired
    chunk, else a multiple-of-8 chunk (final-chunk overhang is masked in-kernel)."""
    if rows <= desired:
        return rows, 1
    chunk = max((desired // 8) * 8, 8)
    return chunk, pl.cdiv(rows, chunk)


def _lane_rows(flat_last, n_elem):
    """Reshape a (..., n_elem) array to (..., rows, 128) lane-dense form."""
    pad = (-n_elem) % _LANES
    if pad:
        # TODO(synk): non-128-multiple element counts fall back to one pad copy;
        # in-kernel masking only covers chunk overhang, not a ragged lane tail.
        widths = [(0, 0)] * (flat_last.ndim - 1) + [(0, pad)]
        flat_last = jnp.pad(flat_last, widths)
    rows = (n_elem + pad) // _LANES
    return flat_last.reshape(flat_last.shape[:-1] + (rows, _LANES)), rows


def generator_loss(logits, target, sattn_stack, pattn, img0, img1, *,
                   beta=BETA, bias=BIAS, layers=LAYERS, gammas=GAMMAS,
                   img_chunk_rows=2048, attn_chunk_rows=1024):
    """Pallas implementation of GeneratorLoss.forward.

    output[0] -> logits, output[1] -> sattn_stack (layers stacked on axis 0),
    output[3] -> pattn, image[0]/image[1] -> img0/img1, target -> target.
    """
    layers = tuple(int(x) for x in layers)
    L = len(layers)
    gammas = tuple(float(g) for g in gammas)[:L]
    L_total = sattn_stack.shape[0]

    # --- layer selection without an HBM gather copy when possible ----------
    if layers == tuple(range(L_total)):
        sattn_sel = sattn_stack
    elif layers == tuple(range(layers[0], layers[0] + L)):
        sattn_sel = jax.lax.slice_in_dim(sattn_stack, layers[0], layers[0] + L,
                                         axis=0)
    else:
        # TODO(synk): non-contiguous layer selection falls back to a gather copy.
        sattn_sel = jnp.take(sattn_stack, jnp.asarray(layers, jnp.int32), axis=0)

    B, S, _ = pattn.shape
    Bc, C = logits.shape

    # --- lane-dense, chunk-streamed attention maps --------------------------
    attn_elems = B * S * S
    sattn_2d, attn_rows = _lane_rows(sattn_sel.reshape(L, attn_elems), attn_elems)
    pattn_2d, _ = _lane_rows(pattn.reshape(attn_elems), attn_elems)
    attn_chunk, n_attn_chunks = _pick_chunk(attn_rows, int(attn_chunk_rows))

    # --- lane-dense, chunk-streamed images ----------------------------------
    n_img_elem = int(np.prod(img0.shape))
    img0_2d, img_rows = _lane_rows(img0.reshape(n_img_elem), n_img_elem)
    img1_2d, _ = _lane_rows(img1.reshape(n_img_elem), n_img_elem)
    img_chunk, n_img_chunks = _pick_chunk(img_rows, int(img_chunk_rows))

    n_steps = max(n_attn_chunks, n_img_chunks)
    last_attn = n_attn_chunks - 1
    last_img = n_img_chunks - 1

    tgt = target.astype(jnp.int32).reshape(Bc)

    kernel = functools.partial(
        _generator_loss_kernel, beta=float(beta), bias=float(bias),
        gammas=gammas, n_img_elem=n_img_elem,
        img_rows=img_rows, n_img_chunks=n_img_chunks,
        attn_rows=attn_rows, n_attn_chunks=n_attn_chunks)

    def _bytes(dt):
        return jnp.dtype(dt).itemsize

    vmem_needed = (
        2 * L * attn_chunk * _LANES * _bytes(sattn_2d.dtype)   # sattn, dbl-buffered
        + 2 * attn_chunk * _LANES * _bytes(pattn_2d.dtype)     # pattn, dbl-buffered
        + 2 * 2 * img_chunk * _LANES * _bytes(img0_2d.dtype)   # 2 imgs, dbl-buffered
        + 2 * Bc * C * _bytes(logits.dtype)                    # logits (tiny, const)
        + (L + 1) * 8 * _LANES * 4)                            # accumulator scratch
    # Cap well under v7x's 64 MiB physical VMEM (leave compiler headroom);
    # never the binding constraint on v5e/v6e (128 MiB).
    vmem_limit = int(min(max(vmem_needed + (4 << 20), 16 << 20), 48 << 20))

    grid_spec = pltpu.PrefetchScalarGridSpec(
        num_scalar_prefetch=1,                                 # targets -> SMEM
        grid=(n_steps,),
        in_specs=[
            pl.BlockSpec((L, attn_chunk, _LANES),
                         lambda i, *_: (0, jnp.minimum(i, last_attn), 0)),
            pl.BlockSpec((attn_chunk, _LANES),
                         lambda i, *_: (jnp.minimum(i, last_attn), 0)),
            pl.BlockSpec((Bc, C), lambda i, *_: (0, 0)),
            pl.BlockSpec((img_chunk, _LANES),
                         lambda i, *_: (jnp.minimum(i, last_img), 0)),
            pl.BlockSpec((img_chunk, _LANES),
                         lambda i, *_: (jnp.minimum(i, last_img), 0)),
        ],
        out_specs=pl.BlockSpec((1, 1), lambda i, *_: (0, 0)),
        scratch_shapes=[pltpu.VMEM((8, _LANES), jnp.float32),        # MSE partials
                        pltpu.VMEM((L, 8, _LANES), jnp.float32)])    # misd partials

    # TODO(synk): v7x dual-TensorCore split (leading size-2 "parallel" axis with
    # per-core partial sums) not implemented; single-core streaming only.
    out = pl.pallas_call(
        kernel,
        out_shape=jax.ShapeDtypeStruct((1, 1), jnp.float32),
        grid_spec=grid_spec,
        compiler_params=pltpu.CompilerParams(
            dimension_semantics=("arbitrary",),
            vmem_limit_bytes=vmem_limit),
    )(tgt, sattn_2d, pattn_2d, logits, img0_2d, img1_2d)
    return out[0, 0]


def _reference(logits, target, sattn_sel, pattn, img0, img1,
               *, beta, bias, gammas):
    """Pure-JAX reference reproducing the PyTorch semantics."""
    logp = jax.nn.log_softmax(logits.astype(jnp.float32), axis=-1)
    ce = -jnp.mean(jnp.take_along_axis(logp, target[:, None], axis=-1))
    pf = (1.0 + bias) - pattn.astype(jnp.float32)
    lm = 0.0
    for i in range(sattn_sel.shape[0]):
        s = jnp.sum(sattn_sel[i].astype(jnp.float32) * pf)
        lm = lm + gammas[i] * jnp.log(jnp.maximum(s, 1.0))
    mse = jnp.mean((img0.astype(jnp.float32) - img1.astype(jnp.float32)) ** 2)
    return mse + lm - beta * ce


if __name__ == "__main__":
    key = jax.random.PRNGKey(0)
    k1, k2, k3, k4, k5, k6 = jax.random.split(key, 6)

    B, NUM_CLASSES, S, L = 2, 8, 16, 6
    Cimg, H, W = 4, 16, 16

    logits = jax.random.normal(k1, (B, NUM_CLASSES), dtype=jnp.float32)
    target = jax.random.randint(k2, (B,), 0, NUM_CLASSES, dtype=jnp.int32)
    # attention-like maps in [0, 1)
    sattn_stack = jax.random.uniform(k3, (L, B, S, S), dtype=jnp.float32)
    pattn = jax.random.uniform(k4, (B, S, S), dtype=jnp.float32)
    img0 = jax.random.normal(k5, (B, Cimg, H, W), dtype=jnp.float32)
    img1 = jax.random.normal(k6, (B, Cimg, H, W), dtype=jnp.float32)

    lg = generator_loss(logits, target, sattn_stack, pattn, img0, img1)
    lg = jax.block_until_ready(lg)

    ref = _reference(logits, target, sattn_stack, pattn, img0, img1,
                     beta=BETA, bias=BIAS, gammas=GAMMAS)
    ref = jax.block_until_ready(ref)

    np.testing.assert_allclose(np.asarray(lg), np.asarray(ref),
                               rtol=1e-5, atol=1e-5)
    print("KERNEL_OK")
</pallas_src>

<mosaic_0001>
module attributes {stable_mosaic.version = 11 : i64} {
  func.func @_generator_loss_kernel(%arg0: i32, %arg1: memref<2xi32, #tpu.memory_space<smem>>, %arg2: memref<6x4x128xf32, #tpu.memory_space<vmem>>, %arg3: memref<4x128xf32, #tpu.memory_space<vmem>>, %arg4: memref<2x8xf32, #tpu.memory_space<vmem>>, %arg5: memref<16x128xf32, #tpu.memory_space<vmem>>, %arg6: memref<16x128xf32, #tpu.memory_space<vmem>>, %arg7: memref<1x1xf32, #tpu.memory_space<vmem>>, %arg8: memref<8x128xf32, #tpu.memory_space<vmem>>, %arg9: memref<6x8x128xf32, #tpu.memory_space<vmem>>) attributes {dimension_semantics = [#tpu.dimension_semantics<arbitrary>], iteration_bounds = array<i64: 1>, scalar_prefetch = 1 : i64, scratch_operands = 2 : i64, tpu.core_type = #tpu.core_type<tc>, window_params = [{transform_indices = @transform_0, window_bounds = array<i64: 6, 4, 128>}, {transform_indices = @transform_1, window_bounds = array<i64: 4, 128>}, {pipeline_mode = #tpu.pipeline_mode<synchronous>, transform_indices = @transform_2, window_bounds = array<i64: 2, 8>}, {transform_indices = @transform_3, window_bounds = array<i64: 16, 128>}, {transform_indices = @transform_4, window_bounds = array<i64: 16, 128>}, {pipeline_mode = #tpu.pipeline_mode<synchronous>, transform_indices = @transform_5, window_bounds = array<i64: 1, 1>}]} {
    %c0_i32 = arith.constant 0 : i32
    %0 = arith.cmpi eq, %arg0, %c0_i32 : i32
    %1 = arith.extui %0 : i1 to i32
    %c0_i32_0 = arith.constant 0 : i32
    %2 = arith.cmpi ne, %1, %c0_i32_0 : i32
    scf.if %2 {
      %cst = arith.constant 0.000000e+00 : f32
      %12 = vector.broadcast %cst : f32 to vector<8x128xf32>
      %c0 = arith.constant 0 : index
      %c0_6 = arith.constant 0 : index
      %13 = vector.load %arg8[%c0, %c0_6] : memref<8x128xf32, #tpu.memory_space<vmem>>, vector<8x128xf32>
      tpu.vector_store %arg8[%c0, %c0_6], %12 {strides = array<i32>} : memref<8x128xf32, #tpu.memory_space<vmem>>, vector<8x128xf32>,
      %cst_7 = arith.constant 0.000000e+00 : f32
      %14 = vector.broadcast %cst_7 : f32 to vector<6x8x128xf32>
      %c0_8 = arith.constant 0 : index
      %c0_9 = arith.constant 0 : index
      %c0_10 = arith.constant 0 : index
      %15 = vector.load %arg9[%c0_8, %c0_9, %c0_10] : memref<6x8x128xf32, #tpu.memory_space<vmem>>, vector<6x8x128xf32>
      tpu.vector_store %arg9[%c0_8, %c0_9, %c0_10], %14 {strides = array<i32>} : memref<6x8x128xf32, #tpu.memory_space<vmem>>, vector<6x8x128xf32>,
    } else {
    }
    %c1_i32 = arith.constant 1 : i32
    %3 = arith.cmpi slt, %arg0, %c1_i32 : i32
    %4 = arith.extui %3 : i1 to i32
    %c0_i32_1 = arith.constant 0 : i32
    %5 = arith.cmpi ne, %4, %c0_i32_1 : i32
    scf.if %5 {
      %c0 = arith.constant 0 : index
      %c0_6 = arith.constant 0 : index
      %12 = vector.load %arg5[%c0, %c0_6] : memref<16x128xf32, #tpu.memory_space<vmem>>, vector<16x128xf32>
      %c0_7 = arith.constant 0 : index
      %c0_8 = arith.constant 0 : index
      %13 = vector.load %arg6[%c0_7, %c0_8] : memref<16x128xf32, #tpu.memory_space<vmem>>, vector<16x128xf32>
      %14 = arith.subf %12, %13 : vector<16x128xf32>
      %15 = arith.mulf %14, %14 : vector<16x128xf32>
      %16 = tpu.iota {dimensions = array<i32: 0>} : vector<16x128xi32>
      %c16_i32 = arith.constant 16 : i32
      %17 = arith.muli %arg0, %c16_i32 : i32
      %18 = vector.broadcast %17 : i32 to vector<16x128xi32>
      %19 = arith.addi %16, %18 : vector<16x128xi32>
      %c16_i32_9 = arith.constant 16 : i32
      %20 = vector.broadcast %c16_i32_9 : i32 to vector<16x128xi32>
      %21 = arith.cmpi slt, %19, %20 : vector<16x128xi32>
      %cst = arith.constant 0.000000e+00 : f32
      %22 = vector.broadcast %cst : f32 to vector<16x128xf32>
      %23 = arith.select %21, %15, %22 : vector<16x128xi1>, vector<16x128xf32>
      %c0_10 = arith.constant 0 : index
      %c0_11 = arith.constant 0 : index
      %24 = vector.load %arg8[%c0_10, %c0_11] : memref<8x128xf32, #tpu.memory_space<vmem>>, vector<8x128xf32>
      %25 = vector.shape_cast %23 : vector<16x128xf32> to vector<2x8x128xf32>
      %cst_12 = arith.constant dense<0.000000e+00> : vector<8x128xf32>
      %26 = vector.multi_reduction <add>, %25, %cst_12 [0] : vector<2x8x128xf32> to vector<8x128xf32>
      %27 = arith.addf %24, %26 : vector<8x128xf32>
      %c0_13 = arith.constant 0 : index
      %c0_14 = arith.constant 0 : index
      %28 = vector.load %arg8[%c0_13, %c0_14] : memref<8x128xf32, #tpu.memory_space<vmem>>, vector<8x128xf32>
      tpu.vector_store %arg8[%c0_13, %c0_14], %27 {strides = array<i32>} : memref<8x128xf32, #tpu.memory_space<vmem>>, vector<8x128xf32>,
    } else {
    }
    %c1_i32_2 = arith.constant 1 : i32
    %6 = arith.cmpi slt, %arg0, %c1_i32_2 : i32
    %7 = arith.extui %6 : i1 to i32
    %c0_i32_3 = arith.constant 0 : i32
    %8 = arith.cmpi ne, %7, %c0_i32_3 : i32
    scf.if %8 {
      %c0 = arith.constant 0 : index
      %c0_6 = arith.constant 0 : index
      %12 = vector.load %arg3[%c0, %c0_6] : memref<4x128xf32, #tpu.memory_space<vmem>>, vector<4x128xf32>
      %cst = arith.constant 0.829999983 : f32
      %13 = vector.broadcast %cst : f32 to vector<4x128xf32>
      %14 = arith.subf %13, %12 : vector<4x128xf32>
      %15 = tpu.iota {dimensions = array<i32: 0>} : vector<4x128xi32>
      %c4_i32 = arith.constant 4 : i32
      %16 = arith.muli %arg0, %c4_i32 : i32
      %17 = vector.broadcast %16 : i32 to vector<4x128xi32>
      %18 = arith.addi %15, %17 : vector<4x128xi32>
      %c4_i32_7 = arith.constant 4 : i32
      %19 = vector.broadcast %c4_i32_7 : i32 to vector<4x128xi32>
      %20 = arith.cmpi slt, %18, %19 : vector<4x128xi32>
      %c0_8 = arith.constant 0 : index
      %c0_9 = arith.constant 0 : index
      %c0_10 = arith.constant 0 : index
      %21 = vector.load %arg2[%c0_8, %c0_9, %c0_10] : memref<6x4x128xf32, #tpu.memory_space<vmem>>, vector<1x4x128xf32>
      %22 = vector.shape_cast %21 : vector<1x4x128xf32> to vector<4x128xf32>
      %23 = arith.mulf %22, %14 : vector<4x128xf32>
      %cst_11 = arith.constant 0.000000e+00 : f32
      %24 = vector.broadcast %cst_11 : f32 to vector<4x128xf32>
      %25 = arith.select %20, %23, %24 : vector<4x128xi1>, vector<4x128xf32>
      %c0_12 = arith.constant 0 : index
      %c0_13 = arith.constant 0 : index
      %c0_14 = arith.constant 0 : index
      %26 = vector.load %arg9[%c0_12, %c0_13, %c0_14] : memref<6x8x128xf32, #tpu.memory_space<vmem>>, vector<1x1x128xf32>
      %27 = vector.shape_cast %26 : vector<1x1x128xf32> to vector<1x128xf32>
      %cst_15 = arith.constant dense<0.000000e+00> : vector<128xf32>
      %28 = vector.multi_reduction <add>, %25, %cst_15 [0] : vector<4x128xf32> to vector<128xf32>
      %29 = vector.shape_cast %28 : vector<128xf32> to vector<1x128xf32>
      %30 = arith.addf %27, %29 : vector<1x128xf32>
      %c0_16 = arith.constant 0 : index
      %c0_17 = arith.constant 0 : index
      %c0_18 = arith.constant 0 : index
      %31 = vector.load %arg9[%c0_16, %c0_17, %c0_18] : memref<6x8x128xf32, #tpu.memory_space<vmem>>, vector<1x1x128xf32>
      %32 = vector.shape_cast %31 : vector<1x1x128xf32> to vector<1x128xf32>
      %33 = vector.shape_cast %30 : vector<1x128xf32> to vector<1x1x128xf32>
      tpu.vector_store %arg9[%c0_16, %c0_17, %c0_18], %33 {strides = array<i32>} : memref<6x8x128xf32, #tpu.memory_space<vmem>>, vector<1x1x128xf32>,
      %c1 = arith.constant 1 : index
      %c0_19 = arith.constant 0 : index
      %c0_20 = arith.constant 0 : index
      %34 = vector.load %arg2[%c1, %c0_19, %c0_20] : memref<6x4x128xf32, #tpu.memory_space<vmem>>, vector<1x4x128xf32>
      %35 = vector.shape_cast %34 : vector<1x4x128xf32> to vector<4x128xf32>
      %36 = arith.mulf %35, %14 : vector<4x128xf32>
      %cst_21 = arith.constant 0.000000e+00 : f32
      %37 = vector.broadcast %cst_21 : f32 to vector<4x128xf32>
      %38 = arith.select %20, %36, %37 : vector<4x128xi1>, vector<4x128xf32>
      %c1_22 = arith.constant 1 : index
      %c0_23 = arith.constant 0 : index
      %c0_24 = arith.constant 0 : index
      %39 = vector.load %arg9[%c1_22, %c0_23, %c0_24] : memref<6x8x128xf32, #tpu.memory_space<vmem>>, vector<1x1x128xf32>
      %40 = vector.shape_cast %39 : vector<1x1x128xf32> to vector<1x128xf32>
      %cst_25 = arith.constant dense<0.000000e+00> : vector<128xf32>
      %41 = vector.multi_reduction <add>, %38, %cst_25 [0] : vector<4x128xf32> to vector<128xf32>
      %42 = vector.shape_cast %41 : vector<128xf32> to vector<1x128xf32>
      %43 = arith.addf %40, %42 : vector<1x128xf32>
      %c1_26 = arith.constant 1 : index
      %c0_27 = arith.constant 0 : index
      %c0_28 = arith.constant 0 : index
      %44 = vector.load %arg9[%c1_26, %c0_27, %c0_28] : memref<6x8x128xf32, #tpu.memory_space<vmem>>, vector<1x1x128xf32>
      %45 = vector.shape_cast %44 : vector<1x1x128xf32> to vector<1x128xf32>
      %46 = vector.shape_cast %43 : vector<1x128xf32> to vector<1x1x128xf32>
      tpu.vector_store %arg9[%c1_26, %c0_27, %c0_28], %46 {strides = array<i32>} : memref<6x8x128xf32, #tpu.memory_space<vmem>>, vector<1x1x128xf32>,
      %c2 = arith.constant 2 : index
      %c0_29 = arith.constant 0 : index
      %c0_30 = arith.constant 0 : index
      %47 = vector.load %arg2[%c2, %c0_29, %c0_30] : memref<6x4x128xf32, #tpu.memory_space<vmem>>, vector<1x4x128xf32>
      %48 = vector.shape_cast %47 : vector<1x4x128xf32> to vector<4x128xf32>
      %49 = arith.mulf %48, %14 : vector<4x128xf32>
      %cst_31 = arith.constant 0.000000e+00 : f32
      %50 = vector.broadcast %cst_31 : f32 to vector<4x128xf32>
      %51 = arith.select %20, %49, %50 : vector<4x128xi1>, vector<4x128xf32>
      %c2_32 = arith.constant 2 : index
      %c0_33 = arith.constant 0 : index
      %c0_34 = arith.constant 0 : index
      %52 = vector.load %arg9[%c2_32, %c0_33, %c0_34] : memref<6x8x128xf32, #tpu.memory_space<vmem>>, vector<1x1x128xf32>
      %53 = vector.shape_cast %52 : vector<1x1x128xf32> to vector<1x128xf32>
      %cst_35 = arith.constant dense<0.000000e+00> : vector<128xf32>
      %54 = vector.multi_reduction <add>, %51, %cst_35 [0] : vector<4x128xf32> to vector<128xf32>
      %55 = vector.shape_cast %54 : vector<128xf32> to vector<1x128xf32>
      %56 = arith.addf %53, %55 : vector<1x128xf32>
      %c2_36 = arith.constant 2 : index
      %c0_37 = arith.constant 0 : index
      %c0_38 = arith.constant 0 : index
      %57 = vector.load %arg9[%c2_36, %c0_37, %c0_38] : memref<6x8x128xf32, #tpu.memory_space<vmem>>, vector<1x1x128xf32>
      %58 = vector.shape_cast %57 : vector<1x1x128xf32> to vector<1x128xf32>
      %59 = vector.shape_cast %56 : vector<1x128xf32> to vector<1x1x128xf32>
      tpu.vector_store %arg9[%c2_36, %c0_37, %c0_38], %59 {strides = array<i32>} : memref<6x8x128xf32, #tpu.memory_space<vmem>>, vector<1x1x128xf32>,
      %c3 = arith.constant 3 : index
      %c0_39 = arith.constant 0 : index
      %c0_40 = arith.constant 0 : index
      %60 = vector.load %arg2[%c3, %c0_39, %c0_40] : memref<6x4x128xf32, #tpu.memory_space<vmem>>, vector<1x4x128xf32>
      %61 = vector.shape_cast %60 : vector<1x4x128xf32> to vector<4x128xf32>
      %62 = arith.mulf %61, %14 : vector<4x128xf32>
      %cst_41 = arith.constant 0.000000e+00 : f32
      %63 = vector.broadcast %cst_41 : f32 to vector<4x128xf32>
      %64 = arith.select %20, %62, %63 : vector<4x128xi1>, vector<4x128xf32>
      %c3_42 = arith.constant 3 : index
      %c0_43 = arith.constant 0 : index
      %c0_44 = arith.constant 0 : index
      %65 = vector.load %arg9[%c3_42, %c0_43, %c0_44] : memref<6x8x128xf32, #tpu.memory_space<vmem>>, vector<1x1x128xf32>
      %66 = vector.shape_cast %65 : vector<1x1x128xf32> to vector<1x128xf32>
      %cst_45 = arith.constant dense<0.000000e+00> : vector<128xf32>
      %67 = vector.multi_reduction <add>, %64, %cst_45 [0] : vector<4x128xf32> to vector<128xf32>
      %68 = vector.shape_cast %67 : vector<128xf32> to vector<1x128xf32>
      %69 = arith.addf %66, %68 : vector<1x128xf32>
      %c3_46 = arith.constant 3 : index
      %c0_47 = arith.constant 0 : index
      %c0_48 = arith.constant 0 : index
      %70 = vector.load %arg9[%c3_46, %c0_47, %c0_48] : memref<6x8x128xf32, #tpu.memory_space<vmem>>, vector<1x1x128xf32>
      %71 = vector.shape_cast %70 : vector<1x1x128xf32> to vector<1x128xf32>
      %72 = vector.shape_cast %69 : vector<1x128xf32> to vector<1x1x128xf32>
      tpu.vector_store %arg9[%c3_46, %c0_47, %c0_48], %72 {strides = array<i32>} : memref<6x8x128xf32, #tpu.memory_space<vmem>>, vector<1x1x128xf32>,
      %c4 = arith.constant 4 : index
      %c0_49 = arith.constant 0 : index
      %c0_50 = arith.constant 0 : index
      %73 = vector.load %arg2[%c4, %c0_49, %c0_50] : memref<6x4x128xf32, #tpu.memory_space<vmem>>, vector<1x4x128xf32>
      %74 = vector.shape_cast %73 : vector<1x4x128xf32> to vector<4x128xf32>
      %75 = arith.mulf %74, %14 : vector<4x128xf32>
      %cst_51 = arith.constant 0.000000e+00 : f32
      %76 = vector.broadcast %cst_51 : f32 to vector<4x128xf32>
      %77 = arith.select %20, %75, %76 : vector<4x128xi1>, vector<4x128xf32>
      %c4_52 = arith.constant 4 : index
      %c0_53 = arith.constant 0 : index
      %c0_54 = arith.constant 0 : index
      %78 = vector.load %arg9[%c4_52, %c0_53, %c0_54] : memref<6x8x128xf32, #tpu.memory_space<vmem>>, vector<1x1x128xf32>
      %79 = vector.shape_cast %78 : vector<1x1x128xf32> to vector<1x128xf32>
      %cst_55 = arith.constant dense<0.000000e+00> : vector<128xf32>
      %80 = vector.multi_reduction <add>, %77, %cst_55 [0] : vector<4x128xf32> to vector<128xf32>
      %81 = vector.shape_cast %80 : vector<128xf32> to vector<1x128xf32>
      %82 = arith.addf %79, %81 : vector<1x128xf32>
      %c4_56 = arith.constant 4 : index
      %c0_57 = arith.constant 0 : index
      %c0_58 = arith.constant 0 : index
      %83 = vector.load %arg9[%c4_56, %c0_57, %c0_58] : memref<6x8x128xf32, #tpu.memory_space<vmem>>, vector<1x1x128xf32>
      %84 = vector.shape_cast %83 : vector<1x1x128xf32> to vector<1x128xf32>
      %85 = vector.shape_cast %82 : vector<1x128xf32> to vector<1x1x128xf32>
      tpu.vector_store %arg9[%c4_56, %c0_57, %c0_58], %85 {strides = array<i32>} : memref<6x8x128xf32, #tpu.memory_space<vmem>>, vector<1x1x128xf32>,
      %c5 = arith.constant 5 : index
      %c0_59 = arith.constant 0 : index
      %c0_60 = arith.constant 0 : index
      %86 = vector.load %arg2[%c5, %c0_59, %c0_60] : memref<6x4x128xf32, #tpu.memory_space<vmem>>, vector<1x4x128xf32>
      %87 = vector.shape_cast %86 : vector<1x4x128xf32> to vector<4x128xf32>
      %88 = arith.mulf %87, %14 : vector<4x128xf32>
      %cst_61 = arith.constant 0.000000e+00 : f32
      %89 = vector.broadcast %cst_61 : f32 to vector<4x128xf32>
      %90 = arith.select %20, %88, %89 : vector<4x128xi1>, vector<4x128xf32>
      %c5_62 = arith.constant 5 : index
      %c0_63 = arith.constant 0 : index
      %c0_64 = arith.constant 0 : index
      %91 = vector.load %arg9[%c5_62, %c0_63, %c0_64] : memref<6x8x128xf32, #tpu.memory_space<vmem>>, vector<1x1x128xf32>
      %92 = vector.shape_cast %91 : vector<1x1x128xf32> to vector<1x128xf32>
      %cst_65 = arith.constant dense<0.000000e+00> : vector<128xf32>
      %93 = vector.multi_reduction <add>, %90, %cst_65 [0] : vector<4x128xf32> to vector<128xf32>
      %94 = vector.shape_cast %93 : vector<128xf32> to vector<1x128xf32>
      %95 = arith.addf %92, %94 : vector<1x128xf32>
      %c5_66 = arith.constant 5 : index
      %c0_67 = arith.constant 0 : index
      %c0_68 = arith.constant 0 : index
      %96 = vector.load %arg9[%c5_66, %c0_67, %c0_68] : memref<6x8x128xf32, #tpu.memory_space<vmem>>, vector<1x1x128xf32>
      %97 = vector.shape_cast %96 : vector<1x1x128xf32> to vector<1x128xf32>
      %98 = vector.shape_cast %95 : vector<1x128xf32> to vector<1x1x128xf32>
      tpu.vector_store %arg9[%c5_66, %c0_67, %c0_68], %98 {strides = array<i32>} : memref<6x8x128xf32, #tpu.memory_space<vmem>>, vector<1x1x128xf32>,
    } else {
    }
    %c0_i32_4 = arith.constant 0 : i32
    %9 = arith.cmpi eq, %arg0, %c0_i32_4 : i32
    %10 = arith.extui %9 : i1 to i32
    %c0_i32_5 = arith.constant 0 : i32
    %11 = arith.cmpi ne, %10, %c0_i32_5 : i32
    scf.if %11 {
      %c0 = arith.constant 0 : index
      %c0_6 = arith.constant 0 : index
      %12 = vector.load %arg8[%c0, %c0_6] : memref<8x128xf32, #tpu.memory_space<vmem>>, vector<8x128xf32>
      %cst = arith.constant dense<0.000000e+00> : vector<8xf32>
      %13 = vector.multi_reduction <add>, %12, %cst [1] : vector<8x128xf32> to vector<8xf32>
      %14 = vector.shape_cast %13 : vector<8xf32> to vector<8x1xf32>
      %cst_7 = arith.constant dense<0.000000e+00> : vector<1xf32>
      %15 = vector.multi_reduction <add>, %14, %cst_7 [0] : vector<8x1xf32> to vector<1xf32>
      %16 = vector.shape_cast %15 : vector<1xf32> to vector<1x1xf32>
      %cst_8 = arith.constant 4.8828125E-4 : f32
      %17 = vector.broadcast %cst_8 : f32 to vector<1x1xf32>
      %18 = arith.mulf %16, %17 : vector<1x1xf32>
      %cst_9 = arith.constant 0.000000e+00 : f32
      %19 = vector.broadcast %cst_9 : f32 to vector<1x1xf32>
      %c0_10 = arith.constant 0 : index
      %c0_11 = arith.constant 0 : index
      %c0_12 = arith.constant 0 : index
      %20 = vector.load %arg9[%c0_10, %c0_11, %c0_12] : memref<6x8x128xf32, #tpu.memory_space<vmem>>, vector<1x8x128xf32>
      %21 = vector.shape_cast %20 : vector<1x8x128xf32> to vector<8x128xf32>
      %cst_13 = arith.constant dense<0.000000e+00> : vector<8xf32>
      %22 = vector.multi_reduction <add>, %21, %cst_13 [1] : vector<8x128xf32> to vector<8xf32>
      %23 = vector.shape_cast %22 : vector<8xf32> to vector<8x1xf32>
      %cst_14 = arith.constant dense<0.000000e+00> : vector<1xf32>
      %24 = vector.multi_reduction <add>, %23, %cst_14 [0] : vector<8x1xf32> to vector<1xf32>
      %25 = vector.shape_cast %24 : vector<1xf32> to vector<1x1xf32>
      %cst_15 = arith.constant 1.000000e+00 : f32
      %26 = vector.broadcast %cst_15 : f32 to vector<1x1xf32>
      %27 = arith.maximumf %25, %26 : vector<1x1xf32>
      %28 = math.log %27 : vector<1x1xf32>
      %cst_16 = arith.constant 2.000000e-04 : f32
      %29 = vector.broadcast %cst_16 : f32 to vector<1x1xf32>
      %30 = arith.mulf %29, %28 : vector<1x1xf32>
      %31 = arith.addf %19, %30 : vector<1x1xf32>
      %c1 = arith.constant 1 : index
      %c0_17 = arith.constant 0 : index
      %c0_18 = arith.constant 0 : index
      %32 = vector.load %arg9[%c1, %c0_17, %c0_18] : memref<6x8x128xf32, #tpu.memory_space<vmem>>, vector<1x8x128xf32>
      %33 = vector.shape_cast %32 : vector<1x8x128xf32> to vector<8x128xf32>
      %cst_19 = arith.constant dense<0.000000e+00> : vector<8xf32>
      %34 = vector.multi_reduction <add>, %33, %cst_19 [1] : vector<8x128xf32> to vector<8xf32>
      %35 = vector.shape_cast %34 : vector<8xf32> to vector<8x1xf32>
      %cst_20 = arith.constant dense<0.000000e+00> : vector<1xf32>
      %36 = vector.multi_reduction <add>, %35, %cst_20 [0] : vector<8x1xf32> to vector<1xf32>
      %37 = vector.shape_cast %36 : vector<1xf32> to vector<1x1xf32>
      %cst_21 = arith.constant 1.000000e+00 : f32
      %38 = vector.broadcast %cst_21 : f32 to vector<1x1xf32>
      %39 = arith.maximumf %37, %38 : vector<1x1xf32>
      %40 = math.log %39 : vector<1x1xf32>
      %cst_22 = arith.constant 2.000000e-04 : f32
      %41 = vector.broadcast %cst_22 : f32 to vector<1x1xf32>
      %42 = arith.mulf %41, %40 : vector<1x1xf32>
      %43 = arith.addf %31, %42 : vector<1x1xf32>
      %c2 = arith.constant 2 : index
      %c0_23 = arith.constant 0 : index
      %c0_24 = arith.constant 0 : index
      %44 = vector.load %arg9[%c2, %c0_23, %c0_24] : memref<6x8x128xf32, #tpu.memory_space<vmem>>, vector<1x8x128xf32>
      %45 = vector.shape_cast %44 : vector<1x8x128xf32> to vector<8x128xf32>
      %cst_25 = arith.constant dense<0.000000e+00> : vector<8xf32>
      %46 = vector.multi_reduction <add>, %45, %cst_25 [1] : vector<8x128xf32> to vector<8xf32>
      %47 = vector.shape_cast %46 : vector<8xf32> to vector<8x1xf32>
      %cst_26 = arith.constant dense<0.000000e+00> : vector<1xf32>
      %48 = vector.multi_reduction <add>, %47, %cst_26 [0] : vector<8x1xf32> to vector<1xf32>
      %49 = vector.shape_cast %48 : vector<1xf32> to vector<1x1xf32>
      %cst_27 = arith.constant 1.000000e+00 : f32
      %50 = vector.broadcast %cst_27 : f32 to vector<1x1xf32>
      %51 = arith.maximumf %49, %50 : vector<1x1xf32>
      %52 = math.log %51 : vector<1x1xf32>
      %cst_28 = arith.constant 2.000000e-04 : f32
      %53 = vector.broadcast %cst_28 : f32 to vector<1x1xf32>
      %54 = arith.mulf %53, %52 : vector<1x1xf32>
      %55 = arith.addf %43, %54 : vector<1x1xf32>
      %c3 = arith.constant 3 : index
      %c0_29 = arith.constant 0 : index
      %c0_30 = arith.constant 0 : index
      %56 = vector.load %arg9[%c3, %c0_29, %c0_30] : memref<6x8x128xf32, #tpu.memory_space<vmem>>, vector<1x8x128xf32>
      %57 = vector.shape_cast %56 : vector<1x8x128xf32> to vector<8x128xf32>
      %cst_31 = arith.constant dense<0.000000e+00> : vector<8xf32>
      %58 = vector.multi_reduction <add>, %57, %cst_31 [1] : vector<8x128xf32> to vector<8xf32>
      %59 = vector.shape_cast %58 : vector<8xf32> to vector<8x1xf32>
      %cst_32 = arith.constant dense<0.000000e+00> : vector<1xf32>
      %60 = vector.multi_reduction <add>, %59, %cst_32 [0] : vector<8x1xf32> to vector<1xf32>
      %61 = vector.shape_cast %60 : vector<1xf32> to vector<1x1xf32>
      %cst_33 = arith.constant 1.000000e+00 : f32
      %62 = vector.broadcast %cst_33 : f32 to vector<1x1xf32>
      %63 = arith.maximumf %61, %62 : vector<1x1xf32>
      %64 = math.log %63 : vector<1x1xf32>
      %cst_34 = arith.constant 2.000000e-04 : f32
      %65 = vector.broadcast %cst_34 : f32 to vector<1x1xf32>
      %66 = arith.mulf %65, %64 : vector<1x1xf32>
      %67 = arith.addf %55, %66 : vector<1x1xf32>
      %c4 = arith.constant 4 : index
      %c0_35 = arith.constant 0 : index
      %c0_36 = arith.constant 0 : index
      %68 = vector.load %arg9[%c4, %c0_35, %c0_36] : memref<6x8x128xf32, #tpu.memory_space<vmem>>, vector<1x8x128xf32>
      %69 = vector.shape_cast %68 : vector<1x8x128xf32> to vector<8x128xf32>
      %cst_37 = arith.constant dense<0.000000e+00> : vector<8xf32>
      %70 = vector.multi_reduction <add>, %69, %cst_37 [1] : vector<8x128xf32> to vector<8xf32>
      %71 = vector.shape_cast %70 : vector<8xf32> to vector<8x1xf32>
      %cst_38 = arith.constant dense<0.000000e+00> : vector<1xf32>
      %72 = vector.multi_reduction <add>, %71, %cst_38 [0] : vector<8x1xf32> to vector<1xf32>
      %73 = vector.shape_cast %72 : vector<1xf32> to vector<1x1xf32>
      %cst_39 = arith.constant 1.000000e+00 : f32
      %74 = vector.broadcast %cst_39 : f32 to vector<1x1xf32>
      %75 = arith.maximumf %73, %74 : vector<1x1xf32>
      %76 = math.log %75 : vector<1x1xf32>
      %cst_40 = arith.constant 2.000000e-04 : f32
      %77 = vector.broadcast %cst_40 : f32 to vector<1x1xf32>
      %78 = arith.mulf %77, %76 : vector<1x1xf32>
      %79 = arith.addf %67, %78 : vector<1x1xf32>
      %c5 = arith.constant 5 : index
      %c0_41 = arith.constant 0 : index
      %c0_42 = arith.constant 0 : index
      %80 = vector.load %arg9[%c5, %c0_41, %c0_42] : memref<6x8x128xf32, #tpu.memory_space<vmem>>, vector<1x8x128xf32>
      %81 = vector.shape_cast %80 : vector<1x8x128xf32> to vector<8x128xf32>
      %cst_43 = arith.constant dense<0.000000e+00> : vector<8xf32>
      %82 = vector.multi_reduction <add>, %81, %cst_43 [1] : vector<8x128xf32> to vector<8xf32>
      %83 = vector.shape_cast %82 : vector<8xf32> to vector<8x1xf32>
      %cst_44 = arith.constant dense<0.000000e+00> : vector<1xf32>
      %84 = vector.multi_reduction <add>, %83, %cst_44 [0] : vector<8x1xf32> to vector<1xf32>
      %85 = vector.shape_cast %84 : vector<1xf32> to vector<1x1xf32>
      %cst_45 = arith.constant 1.000000e+00 : f32
      %86 = vector.broadcast %cst_45 : f32 to vector<1x1xf32>
      %87 = arith.maximumf %85, %86 : vector<1x1xf32>
      %88 = math.log %87 : vector<1x1xf32>
      %cst_46 = arith.constant 2.000000e-04 : f32
      %89 = vector.broadcast %cst_46 : f32 to vector<1x1xf32>
      %90 = arith.mulf %89, %88 : vector<1x1xf32>
      %91 = arith.addf %79, %90 : vector<1x1xf32>
      %c0_47 = arith.constant 0 : index
      %c0_48 = arith.constant 0 : index
      %92 = vector.load %arg4[%c0_47, %c0_48] : memref<2x8xf32, #tpu.memory_space<vmem>>, vector<2x8xf32>
      %cst_49 = arith.constant dense<0xFF800000> : vector<2xf32>
      %93 = vector.multi_reduction <maximumf>, %92, %cst_49 [1] : vector<2x8xf32> to vector<2xf32>
      %94 = vector.shape_cast %93 : vector<2xf32> to vector<2x1xf32>
      %95 = vector.broadcast %94 : vector<2x1xf32> to vector<2x8xf32>
      %96 = arith.subf %92, %95 : vector<2x8xf32>
      %97 = math.exp %96 : vector<2x8xf32>
      %cst_50 = arith.constant dense<0.000000e+00> : vector<2xf32>
      %98 = vector.multi_reduction <add>, %97, %cst_50 [1] : vector<2x8xf32> to vector<2xf32>
      %99 = vector.shape_cast %98 : vector<2xf32> to vector<2x1xf32>
      %100 = math.log %99 : vector<2x1xf32>
      %101 = arith.addf %94, %100 : vector<2x1xf32>
      %102 = tpu.iota {dimensions = array<i32: 0>} : vector<2x1xi32>
      %c0_i32_51 = arith.constant 0 : i32
      %103 = vector.broadcast %c0_i32_51 : i32 to vector<2x1xi32>
      %c0_i32_52 = arith.constant 0 : i32
      %104 = vector.broadcast %c0_i32_52 : i32 to vector<2x1xi32>
      %105 = arith.cmpi eq, %102, %104 : vector<2x1xi32>
      %c0_53 = arith.constant 0 : index
      %106 = memref.load %arg1[%c0_53] : memref<2xi32, #tpu.memory_space<smem>>
      %107 = vector.broadcast %106 : i32 to vector<2x1xi32>
      %108 = arith.select %105, %107, %103 : vector<2x1xi1>, vector<2x1xi32>
      %c1_i32_54 = arith.constant 1 : i32
      %109 = vector.broadcast %c1_i32_54 : i32 to vector<2x1xi32>
      %110 = arith.cmpi eq, %102, %109 : vector<2x1xi32>
      %c1_55 = arith.constant 1 : index
      %111 = memref.load %arg1[%c1_55] : memref<2xi32, #tpu.memory_space<smem>>
      %112 = vector.broadcast %111 : i32 to vector<2x1xi32>
      %113 = arith.select %110, %112, %108 : vector<2x1xi1>, vector<2x1xi32>
      %114 = tpu.iota {dimensions = array<i32: 1>} : vector<2x8xi32>
      %115 = vector.broadcast %113 : vector<2x1xi32> to vector<2x8xi32>
      %116 = arith.cmpi eq, %114, %115 : vector<2x8xi32>
      %cst_56 = arith.constant 0.000000e+00 : f32
      %117 = vector.broadcast %cst_56 : f32 to vector<2x8xf32>
      %118 = arith.select %116, %92, %117 : vector<2x8xi1>, vector<2x8xf32>
      %cst_57 = arith.constant dense<0.000000e+00> : vector<2xf32>
      %119 = vector.multi_reduction <add>, %118, %cst_57 [1] : vector<2x8xf32> to vector<2xf32>
      %120 = vector.shape_cast %119 : vector<2xf32> to vector<2x1xf32>
      %121 = arith.subf %101, %120 : vector<2x1xf32>
      %cst_58 = arith.constant dense<0.000000e+00> : vector<1xf32>
      %122 = vector.multi_reduction <add>, %121, %cst_58 [0] : vector<2x1xf32> to vector<1xf32>
      %123 = vector.shape_cast %122 : vector<1xf32> to vector<1x1xf32>
      %cst_59 = arith.constant 5.000000e-01 : f32
      %124 = vector.broadcast %cst_59 : f32 to vector<1x1xf32>
      %125 = arith.mulf %123, %124 : vector<1x1xf32>
      %126 = arith.addf %18, %91 : vector<1x1xf32>
      %cst_60 = arith.constant 1.000000e-03 : f32
      %127 = vector.broadcast %cst_60 : f32 to vector<1x1xf32>
      %128 = arith.mulf %127, %125 : vector<1x1xf32>
      %129 = arith.subf %126, %128 : vector<1x1xf32>
      %c0_61 = arith.constant 0 : index
      %c0_62 = arith.constant 0 : index
      %130 = vector.load %arg7[%c0_61, %c0_62] : memref<1x1xf32, #tpu.memory_space<vmem>>, vector<1x1xf32>
      tpu.vector_store %arg7[%c0_61, %c0_62], %129 {strides = array<i32>} : memref<1x1xf32, #tpu.memory_space<vmem>>, vector<1x1xf32>,
    } else {
    }
    return
  }
  func.func @transform_0(%arg0: i32, %arg1: memref<2xi32, #tpu.memory_space<smem>>) -> (i32, i32, i32) {
    %c0_i32 = arith.constant 0 : i32
    %0 = arith.minsi %arg0, %c0_i32 : i32
    %c0_i32_0 = arith.constant 0 : i32
    %c0_i32_1 = arith.constant 0 : i32
    %c0_i32_2 = arith.constant 0 : i32
    return %c0_i32_0, %0, %c0_i32_1 : i32, i32, i32
  }
  func.func @transform_1(%arg0: i32, %arg1: memref<2xi32, #tpu.memory_space<smem>>) -> (i32, i32) {
    %c0_i32 = arith.constant 0 : i32
    %0 = arith.minsi %arg0, %c0_i32 : i32
    %c0_i32_0 = arith.constant 0 : i32
    %c0_i32_1 = arith.constant 0 : i32
    return %0, %c0_i32_0 : i32, i32
  }
  func.func @transform_2(%arg0: i32, %arg1: memref<2xi32, #tpu.memory_space<smem>>) -> (i32, i32) {
    %c0_i32 = arith.constant 0 : i32
    %c0_i32_0 = arith.constant 0 : i32
    %c0_i32_1 = arith.constant 0 : i32
    return %c0_i32, %c0_i32_0 : i32, i32
  }
  func.func @transform_3(%arg0: i32, %arg1: memref<2xi32, #tpu.memory_space<smem>>) -> (i32, i32) {
    %c0_i32 = arith.constant 0 : i32
    %0 = arith.minsi %arg0, %c0_i32 : i32
    %c0_i32_0 = arith.constant 0 : i32
    %c0_i32_1 = arith.constant 0 : i32
    return %0, %c0_i32_0 : i32, i32
  }
  func.func @transform_4(%arg0: i32, %arg1: memref<2xi32, #tpu.memory_space<smem>>) -> (i32, i32) {
    %c0_i32 = arith.constant 0 : i32
    %0 = arith.minsi %arg0, %c0_i32 : i32
    %c0_i32_0 = arith.constant 0 : i32
    %c0_i32_1 = arith.constant 0 : i32
    return %0, %c0_i32_0 : i32, i32
  }
  func.func @transform_5(%arg0: i32, %arg1: memref<2xi32, #tpu.memory_space<smem>>) -> (i32, i32) {
    %c0_i32 = arith.constant 0 : i32
    %c0_i32_0 = arith.constant 0 : i32
    %c0_i32_1 = arith.constant 0 : i32
    return %c0_i32, %c0_i32_0 : i32, i32
  }
}

</mosaic_0001>

<llo_original>
// kernel: tpu_custom_call.1
$region0: #{tpu_custom_call.1}
  #allocation0 [shape = 'u32[]', space=smem, size = 0x4, offset = 0x4, fixed_abs, tag = 'smem constant byte address 0x4 - core index']
  #allocation1 [shape = 'u32[144,128]{1,0:T(1,128)}', space=vmem, size = 0x12000, scoped, tag = 'internal scratch']
  #allocation2 [shape = 'f32[8,128]{1,0:T(8,128)}', space=vmem, size = 0x1000, scoped, tag = 'scratch operand']
  #allocation3 [shape = 'f32[6,8,128]{2,1,0:T(8,128)}', space=vmem, size = 0x6000, scoped, tag = 'scratch operand']
  #allocation4 [shape = 's32[1]{0}', space=sflag, size = 0x4, scoped, tag = 'scoped memory for tpu_custom_call.1']
  #allocation5 [shape = 'u8[512]{0}', space=smem, size = 0x200, scoped, tag = 'prefetched SMEM operand 0']
  %s0 = inlined_call_operand.hbm [shape: s32[2], index: 0, kind: input, shape index: {}]
  %s1 = inlined_call_operand.hbm [shape: f32[6,4,128], index: 1, kind: input, shape index: {}]
  %s2 = inlined_call_operand.hbm [shape: f32[4,128], index: 2, kind: input, shape index: {}]
  %s3 = inlined_call_operand.vmem [shape: f32[2,8], index: 3, kind: input, shape index: {}]
  %s4 = inlined_call_operand.hbm [shape: f32[16,128], index: 4, kind: input, shape index: {}]
  %s5 = inlined_call_operand.hbm [shape: f32[16,128], index: 5, kind: input, shape index: {}]
  %s6 = inlined_call_operand.hbm [shape: f32[1,1], index: 6, kind: output, shape index: {}]
  %s7 = sld [smem:[#allocation0]]
  $region58: #{tpu_custom_call.1} parent=0
    _
  %s9 = ssub.s32 1, %s7
  %s10 = scalar_select 0, %s9, %s7
  %12 = dma.hbm_to_smem %s0, 16, [#allocation5], [#allocation4]
  %13 = dma.done [#allocation4], 16
  %14 = sfence
  $region1: #{tpu_custom_call.1} parent=0
    #allocation6 [shape = 'u8[12288]{0}', space=vmem, size = 0x3000, scoped, tag = 'input window, operand 1, single buffered']
    #allocation7 [shape = 's32[1]{0}', space=sflag, size = 0x4, scoped, tag = 'scoped memory for tpu_custom_call.1']
    #allocation8 [shape = 's32[1]{0}', space=sflag, size = 0x4, scoped, tag = 'scoped memory for tpu_custom_call.1']
    #allocation9 [shape = 'u8[2048]{0}', space=vmem, size = 0x800, scoped, tag = 'input window, operand 2, single buffered']
    #allocation10 [shape = 's32[1]{0}', space=sflag, size = 0x4, scoped, tag = 'scoped memory for tpu_custom_call.1']
    #allocation11 [shape = 'u8[8192]{0}', space=vmem, size = 0x2000, scoped, tag = 'input window, operand 4, single buffered']
    #allocation12 [shape = 'u8[8192]{0}', space=vmem, size = 0x2000, scoped, tag = 'input window, operand 5, single buffered']
    #allocation13 [shape = 's32[1]{0}', space=sflag, size = 0x4, scoped, tag = 'scoped memory for tpu_custom_call.1']
    #allocation14 [shape = 'u8[512]{0}', space=vmem, size = 0x400, scoped, tag = 'output window, operand 0, single buffered']
    %15 = vsyncpa [#allocation7], 0
    %16 = vsyncpa [#allocation10], 0
    %17 = vsyncpa [#allocation13], 0
    %18 = vsyncpa [#allocation8], 0
    // Predicated region
    $region2: #{tpu_custom_call.1} parent=1 // pred_check
      _
    $region3: #{tpu_custom_call.1} parent=1 // pred_check_branch
      %20 = sbr.rel (0) target = $region5
    $region4: #{tpu_custom_call.1} parent=1 // pred_region
      %s22 = ssub.s32 384, 384
      %23 = vsyncadd [#allocation7], %s22
      %s24 = sshll.u32 [#allocation6], 4
      %s25 = int_to_ptr.vmem [resolvable:$true] %s24
      %30 = dma.hbm_to_vmem [thread:$0]  %s1, 384, %s25, [#allocation7], 64, 64, 4
    $region5: #{tpu_custom_call.1} parent=1 // pred_fallthru
      _
    // Predicated region
    $region6: #{tpu_custom_call.1} parent=1 // pred_check
      _
    $region7: #{tpu_custom_call.1} parent=1 // pred_check_branch
      %32 = sbr.rel (0) target = $region9
    $region8: #{tpu_custom_call.1} parent=1 // pred_region
      %s34 = ssub.s32 64, 64
      %35 = vsyncadd [#allocation10], %s34
      %s37 = sshll.u32 [#allocation9], 4
      %s38 = int_to_ptr.vmem [resolvable:$true] %s37
      %40 = dma.hbm_to_vmem [thread:$0]  %s2, 64, %s38, [#allocation10]
    $region9: #{tpu_custom_call.1} parent=1 // pred_fallthru
      _
    // Predicated region
    $region10: #{tpu_custom_call.1} parent=1 // pred_check
      _
    $region11: #{tpu_custom_call.1} parent=1 // pred_check_branch
      %42 = sbr.rel (0) target = $region13
    $region12: #{tpu_custom_call.1} parent=1 // pred_region
      _
    $region13: #{tpu_custom_call.1} parent=1 // pred_fallthru
      _
    // Predicated region
    $region14: #{tpu_custom_call.1} parent=1 // pred_check
      _
    $region15: #{tpu_custom_call.1} parent=1 // pred_check_branch
      %44 = sbr.rel (0) target = $region17
    $region16: #{tpu_custom_call.1} parent=1 // pred_region
      %s46 = ssub.s32 256, 256
      %47 = vsyncadd [#allocation10], %s46
      %s48 = sshll.u32 [#allocation11], 4
      %s49 = int_to_ptr.vmem [resolvable:$true] %s48
      %54 = dma.hbm_to_vmem [thread:$0]  %s4, 256, %s49, [#allocation10], 128, 128, 8
    $region17: #{tpu_custom_call.1} parent=1 // pred_fallthru
      _
    // Predicated region
    $region18: #{tpu_custom_call.1} parent=1 // pred_check
      _
    $region19: #{tpu_custom_call.1} parent=1 // pred_check_branch
      %56 = sbr.rel (0) target = $region21
    $region20: #{tpu_custom_call.1} parent=1 // pred_region
      %s58 = ssub.s32 256, 256
      %59 = vsyncadd [#allocation13], %s58
      %s60 = sshll.u32 [#allocation12], 4
      %s61 = int_to_ptr.vmem [resolvable:$true] %s60
      %66 = dma.hbm_to_vmem [thread:$0]  %s5, 256, %s61, [#allocation13], 128, 128, 8
    $region21: #{tpu_custom_call.1} parent=1 // pred_fallthru
      _
    // Predicated region
    $region22: #{tpu_custom_call.1} parent=1 // pred_check
      _
    $region23: #{tpu_custom_call.1} parent=1 // pred_check_branch
      %68 = sbr.rel (0) target = $region25
    $region24: #{tpu_custom_call.1} parent=1 // pred_region
      %69 = dma.done [#allocation7], 384
    $region25: #{tpu_custom_call.1} parent=1 // pred_fallthru
      _
    // Predicated region
    $region26: #{tpu_custom_call.1} parent=1 // pred_check
      _
    $region27: #{tpu_custom_call.1} parent=1 // pred_check_branch
      %71 = sbr.rel (0) target = $region29
    $region28: #{tpu_custom_call.1} parent=1 // pred_region
      %72 = dma.done [#allocation10], 64
    $region29: #{tpu_custom_call.1} parent=1 // pred_fallthru
      _
    // Predicated region
    $region30: #{tpu_custom_call.1} parent=1 // pred_check
      _
    $region31: #{tpu_custom_call.1} parent=1 // pred_check_branch
      %74 = sbr.rel (0) target = $region33
    $region32: #{tpu_custom_call.1} parent=1 // pred_region
      %75 = dma.done [#allocation10], 256
    $region33: #{tpu_custom_call.1} parent=1 // pred_fallthru
      _
    // Predicated region
    $region34: #{tpu_custom_call.1} parent=1 // pred_check
      _
    $region35: #{tpu_custom_call.1} parent=1 // pred_check_branch
      %77 = sbr.rel (0) target = $region37
    $region36: #{tpu_custom_call.1} parent=1 // pred_region
      %78 = dma.done [#allocation13], 256
    $region37: #{tpu_custom_call.1} parent=1 // pred_fallthru
      _
    %p79 = scmp.eq.s32.totalorder 0, 0
    // Predicated region
    $region38: #{tpu_custom_call.1} parent=1 // pred_check
      %p80 = pneg %p79
    $region39: #{tpu_custom_call.1} parent=1 // pred_check_branch
      %82 = sbr.rel (%p80) target = $region41
    $region40: #{tpu_custom_call.1} parent=1 // pred_region
      %83 = vst [vmem:[#allocation2] sm:$0xff] 0.0
      %84 = vst [vmem:[#allocation3] sm:$0xff] 0.0
      %85 = vst [vmem:[#allocation3 + $0x8] sm:$0xff] 0.0
      %86 = vst [vmem:[#allocation3 + $0x10] sm:$0xff] 0.0
      %87 = vst [vmem:[#allocation3 + $0x18] sm:$0xff] 0.0
      %88 = vst [vmem:[#allocation3 + $0x20] sm:$0xff] 0.0
      %89 = vst [vmem:[#allocation3 + $0x28] sm:$0xff] 0.0
    $region41: #{tpu_custom_call.1} parent=1 // pred_fallthru
      _
    %p90 = scmp.lt.s32.totalorder 0, 1
    // Predicated region
    $region42: #{tpu_custom_call.1} parent=1 // pred_check
      %p91 = pneg %p90
    $region43: #{tpu_custom_call.1} parent=1 // pred_check_branch
      %93 = sbr.rel (%p91) target = $region45
    $region44: #{tpu_custom_call.1} parent=1 // pred_region
      %v94 = vld [vmem:[#allocation11] sm:$0xff]
      %v95 = vld [vmem:[#allocation11 + $0x8] sm:$0xff]
      %v96 = vld [vmem:[#allocation12] sm:$0xff]
      %v97 = vld [vmem:[#allocation12 + $0x8] sm:$0xff]
      %v98 = vsub.f32 %v94, %v96
      %v99 = vsub.f32 %v95, %v97
      %v100 = vmul.f32 %v98, %v98
      %v101 = vmul.f32 %v99, %v99
      %v102 = vlaneseq
      %v103 = vshrl.u32 %v102, 7
      %v104 = vadd.s32 %v103, 8
      %s105 = smul.u32 0, 16
      %v106 = vstv %s105
      %v107 = vadd.s32 %v103, %v106
      %v108 = vadd.s32 %v104, %v106
      %vm109 = vcmp.lt.s32.totalorder %v107, 16
      %vm110 = vcmp.lt.s32.totalorder %v108, 16
      %v111 = vsel %vm109, %v100, 0.0
      %v112 = vsel %vm110, %v101, 0.0
      %v113 = vld [vmem:[#allocation2] sm:$0xff]
      %v114 = vadd.f32 %v111, %v112
      %v115 = vadd.f32 %v113, %v114
      %116 = vst [vmem:[#allocation2] sm:$0xff] %v115
      %v117 = vld [vmem:[#allocation9] sm:$0xf]
      %v118 = vsub.f32 0.83, %v117
      %s119 = smul.u32 0, 4
      %v120 = vstv %s119
      %v121 = vadd.s32 %v103, %v120
      %vm122 = vcmp.lt.s32.totalorder %v121, 4
      %v123 = vld [vmem:[#allocation6] sm:$0xf]
      %v124 = vmul.f32 %v123, %v118
      %v125 = vsel %vm122, %v124, 0.0
      %v126 = vld [vmem:[#allocation3] sm:$0x1]
      %vm127 = vcmask 1043456
      %v128 = vsel %vm127, %v125, 0.0
      %v129 = vrot.slane %v128, 4
      %v130 = vadd.f32 %v128, %v129
      %v131 = vrot.slane %v130, 2
      %v132 = vadd.f32 %v130, %v131
      %v133 = vrot.slane %v132, 1
      %v134 = vadd.f32 %v132, %v133
      %v135 = vadd.f32 %v126, %v134
      %136 = vst [vmem:[#allocation3] sm:$0x1] %v135
      %s137 = scalar_lea.vmem [#allocation6], 4
      %v138 = vld [vmem:[%s137] sm:$0xf]
      %v139 = vmul.f32 %v138, %v118
      %v140 = vsel %vm122, %v139, 0.0
      %s141 = scalar_lea.vmem [#allocation3], 8
      %v142 = vld [vmem:[%s141] sm:$0x1]
      %v143 = vsel %vm127, %v140, 0.0
      %v144 = vrot.slane %v143, 4
      %v145 = vadd.f32 %v143, %v144
      %v146 = vrot.slane %v145, 2
      %v147 = vadd.f32 %v145, %v146
      %v148 = vrot.slane %v147, 1
      %v149 = vadd.f32 %v147, %v148
      %v150 = vadd.f32 %v142, %v149
      %151 = vst [vmem:[%s141] sm:$0x1] %v150
      %s152 = scalar_lea.vmem [#allocation6], 8
      %v153 = vld [vmem:[%s152] sm:$0xf]
      %v154 = vmul.f32 %v153, %v118
      %v155 = vsel %vm122, %v154, 0.0
      %s156 = scalar_lea.vmem [#allocation3], 16
      %v157 = vld [vmem:[%s156] sm:$0x1]
      %v158 = vsel %vm127, %v155, 0.0
      %v159 = vrot.slane %v158, 4
      %v160 = vadd.f32 %v158, %v159
      %v161 = vrot.slane %v160, 2
      %v162 = vadd.f32 %v160, %v161
      %v163 = vrot.slane %v162, 1
      %v164 = vadd.f32 %v162, %v163
      %v165 = vadd.f32 %v157, %v164
      %166 = vst [vmem:[%s156] sm:$0x1] %v165
      %s167 = scalar_lea.vmem [#allocation6], 12
      %v168 = vld [vmem:[%s167] sm:$0xf]
      %v169 = vmul.f32 %v168, %v118
      %v170 = vsel %vm122, %v169, 0.0
      %s171 = scalar_lea.vmem [#allocation3], 24
      %v172 = vld [vmem:[%s171] sm:$0x1]
      %v173 = vsel %vm127, %v170, 0.0
      %v174 = vrot.slane %v173, 4
      %v175 = vadd.f32 %v173, %v174
      %v176 = vrot.slane %v175, 2
      %v177 = vadd.f32 %v175, %v176
      %v178 = vrot.slane %v177, 1
      %v179 = vadd.f32 %v177, %v178
      %v180 = vadd.f32 %v172, %v179
      %181 = vst [vmem:[%s171] sm:$0x1] %v180
      %s182 = scalar_lea.vmem [#allocation6], 16
      %v183 = vld [vmem:[%s182] sm:$0xf]
      %v184 = vmul.f32 %v183, %v118
      %v185 = vsel %vm122, %v184, 0.0
      %s186 = scalar_lea.vmem [#allocation3], 32
      %v187 = vld [vmem:[%s186] sm:$0x1]
      %v188 = vsel %vm127, %v185, 0.0
      %v189 = vrot.slane %v188, 4
      %v190 = vadd.f32 %v188, %v189
      %v191 = vrot.slane %v190, 2
      %v192 = vadd.f32 %v190, %v191
      %v193 = vrot.slane %v192, 1
      %v194 = vadd.f32 %v192, %v193
      %v195 = vadd.f32 %v187, %v194
      %196 = vst [vmem:[%s186] sm:$0x1] %v195
      %s197 = scalar_lea.vmem [#allocation6], 20
      %v198 = vld [vmem:[%s197] sm:$0xf]
      %v199 = vmul.f32 %v198, %v118
      %v200 = vsel %vm122, %v199, 0.0
      %s201 = scalar_lea.vmem [#allocation3], 40
      %v202 = vld [vmem:[%s201] sm:$0x1]
      %v203 = vsel %vm127, %v200, 0.0
      %v204 = vrot.slane %v203, 4
      %v205 = vadd.f32 %v203, %v204
      %v206 = vrot.slane %v205, 2
      %v207 = vadd.f32 %v205, %v206
      %v208 = vrot.slane %v207, 1
      %v209 = vadd.f32 %v207, %v208
      %v210 = vadd.f32 %v202, %v209
      %211 = vst [vmem:[%s201] sm:$0x1] %v210
    $region45: #{tpu_custom_call.1} parent=1 // pred_fallthru
      _
    // Predicated region
    $region46: #{tpu_custom_call.1} parent=1 // pred_check
      %p212 = pneg %p79
    $region47: #{tpu_custom_call.1} parent=1 // pred_check_branch
      %214 = sbr.rel (%p212) target = $region49
    $region48: #{tpu_custom_call.1} parent=1 // pred_region
      %v215 = vld [vmem:[#allocation2] sm:$0xff]
      %216 = vadd.xlane.f32.xlu0 %v215
      %v217 = vpop.xlane.xlu0 %216
      %v218 = vrot.slane %v217, 4
      %v219 = vadd.f32 %v217, %v218
      %v220 = vrot.slane %v219, 2
      %v221 = vadd.f32 %v219, %v220
      %v222 = vrot.slane %v221, 1
      %v223 = vadd.f32 %v221, %v222
      %v224 = vmul.f32 %v223, 0.00048828125
      %v225 = vld [vmem:[#allocation3] sm:$0xff]
      %226 = vadd.xlane.f32.xlu0 %v225
      %v227 = vpop.xlane.xlu0 %226
      %v228 = vrot.slane %v227, 4
      %v229 = vadd.f32 %v227, %v228
      %v230 = vrot.slane %v229, 2
      %v231 = vadd.f32 %v229, %v230
      %v232 = vrot.slane %v231, 1
      %v233 = vadd.f32 %v231, %v232
      %v234 = vmax.f32 %v233, 1.0
      %v235 = vlog2.pop %v234
      %v236 = vmul.f32 %v235, 0.6931472
      %v237 = vmul.f32 %v236, 0.0002
      %v238 = vadd.f32 %v237, 0.0
      %s239 = scalar_lea.vmem [#allocation3], 8
      %v240 = vld [vmem:[%s239] sm:$0xff]
      %241 = vadd.xlane.f32.xlu0 %v240
      %v242 = vpop.xlane.xlu0 %241
      %v243 = vrot.slane %v242, 4
      %v244 = vadd.f32 %v242, %v243
      %v245 = vrot.slane %v244, 2
      %v246 = vadd.f32 %v244, %v245
      %v247 = vrot.slane %v246, 1
      %v248 = vadd.f32 %v246, %v247
      %v249 = vmax.f32 %v248, 1.0
      %v250 = vlog2.pop %v249
      %v251 = vmul.f32 %v250, 0.6931472
      %v252 = vmul.f32 %v251, 0.0002
      %v253 = vadd.f32 %v238, %v252
      %s254 = scalar_lea.vmem [#allocation3], 16
      %v255 = vld [vmem:[%s254] sm:$0xff]
      %256 = vadd.xlane.f32.xlu0 %v255
      %v257 = vpop.xlane.xlu0 %256
      %v258 = vrot.slane %v257, 4
      %v259 = vadd.f32 %v257, %v258
      %v260 = vrot.slane %v259, 2
      %v261 = vadd.f32 %v259, %v260
      %v262 = vrot.slane %v261, 1
      %v263 = vadd.f32 %v261, %v262
      %v264 = vmax.f32 %v263, 1.0
      %v265 = vlog2.pop %v264
      %v266 = vmul.f32 %v265, 0.6931472
      %v267 = vmul.f32 %v266, 0.0002
      %v268 = vadd.f32 %v253, %v267
      %s269 = scalar_lea.vmem [#allocation3], 24
      %v270 = vld [vmem:[%s269] sm:$0xff]
      %271 = vadd.xlane.f32.xlu0 %v270
      %v272 = vpop.xlane.xlu0 %271
      %v273 = vrot.slane %v272, 4
      %v274 = vadd.f32 %v272, %v273
      %v275 = vrot.slane %v274, 2
      %v276 = vadd.f32 %v274, %v275
      %v277 = vrot.slane %v276, 1
      %v278 = vadd.f32 %v276, %v277
      %v279 = vmax.f32 %v278, 1.0
      %v280 = vlog2.pop %v279
      %v281 = vmul.f32 %v280, 0.6931472
      %v282 = vmul.f32 %v281, 0.0002
      %v283 = vadd.f32 %v268, %v282
      %s284 = scalar_lea.vmem [#allocation3], 32
      %v285 = vld [vmem:[%s284] sm:$0xff]
      %286 = vadd.xlane.f32.xlu0 %v285
      %v287 = vpop.xlane.xlu0 %286
      %v288 = vrot.slane %v287, 4
      %v289 = vadd.f32 %v287, %v288
      %v290 = vrot.slane %v289, 2
      %v291 = vadd.f32 %v289, %v290
      %v292 = vrot.slane %v291, 1
      %v293 = vadd.f32 %v291, %v292
      %v294 = vmax.f32 %v293, 1.0
      %v295 = vlog2.pop %v294
      %v296 = vmul.f32 %v295, 0.6931472
      %v297 = vmul.f32 %v296, 0.0002
      %v298 = vadd.f32 %v283, %v297
      %s299 = scalar_lea.vmem [#allocation3], 40
      %v300 = vld [vmem:[%s299] sm:$0xff]
      %301 = vadd.xlane.f32.xlu0 %v300
      %v302 = vpop.xlane.xlu0 %301
      %v303 = vrot.slane %v302, 4
      %v304 = vadd.f32 %v302, %v303
      %v305 = vrot.slane %v304, 2
      %v306 = vadd.f32 %v304, %v305
      %v307 = vrot.slane %v306, 1
      %v308 = vadd.f32 %v306, %v307
      %v309 = vmax.f32 %v308, 1.0
      %v310 = vlog2.pop %v309
      %v311 = vmul.f32 %v310, 0.6931472
      %v312 = vmul.f32 %v311, 0.0002
      %v313 = vadd.f32 %v298, %v312
      %v314 = vld [vmem:[%s3] sm:$0x3]
      %vm315 = vcmask 58368
      %v316 = vsel %vm315, %v314, -inf
      %317 = vmax.xlane.f32.xlu0 %v316
      %v318 = vpop.xlane.xlu0 %317
      %v319 = vsub.f32 %v314, %v318
      %v320 = vmul.f32 %v319, 1.442695
      %v321 = vpow.pop %v320
      %v322 = vsel %vm315, %v321, 0.0
      %323 = vadd.xlane.f32.xlu0 %v322
      %v324 = vpop.xlane.xlu0 %323
      %v325 = vlog2.pop %v324
      %v326 = vmul.f32 %v325, 0.6931472
      %v327 = vadd.f32 %v318, %v326
      %v328 = vlaneseq
      %v329 = vshrl.u32 %v328, 7
      %vm330 = vcmp.eq.s32.totalorder %v329, 0
      %s331 = sld [smem:[#allocation5]]
      %v332 = vstv %s331
      %v333 = vsel %vm330, %v332, 0
      %vm334 = vcmp.eq.s32.totalorder %v329, 1
      %s335 = sld [smem:[#allocation5 + $0x1]]
      %v336 = vstv %s335
      %v337 = vsel %vm334, %v336, %v333
      %v338 = vlaneseq
      %v339 = vand.u32 %v338, 127
      %vm340 = vcmp.eq.s32.totalorder %v339, %v337
      %v341 = vsel %vm340, %v314, 0.0
      %v342 = vsel %vm315, %v341, 0.0
      %343 = vadd.xlane.f32.xlu0 %v342
      %v344 = vpop.xlane.xlu0 %343
      %v345 = vsub.f32 %v327, %v344
      %vm346 = vcmask 1041408
      %v347 = vsel %vm346, %v345, 0.0
      %v348 = vrot.slane %v347, 4
      %v349 = vadd.f32 %v347, %v348
      %v350 = vrot.slane %v349, 2
      %v351 = vadd.f32 %v349, %v350
      %v352 = vrot.slane %v351, 1
      %v353 = vadd.f32 %v351, %v352
      %v354 = vmul.f32 %v353, 0.5
      %v355 = vadd.f32 %v224, %v313
      %v356 = vmul.f32 %v354, 0.001
      %v357 = vsub.f32 %v355, %v356
      %vm358 = vcmask 0
      %359 = vst.msk [vmem:[#allocation14] sm:$0x1] %vm358, %v357
    $region49: #{tpu_custom_call.1} parent=1 // pred_fallthru
      _
    // Predicated region
    $region50: #{tpu_custom_call.1} parent=1 // pred_check
      _
    $region51: #{tpu_custom_call.1} parent=1 // pred_check_branch
      %361 = sbr.rel (0) target = $region53
    $region52: #{tpu_custom_call.1} parent=1 // pred_region
      %s363 = ssub.s32 16, 16
      %364 = vsyncadd [#allocation8], %s363
      %s366 = sshll.u32 [#allocation14], 4
      %s367 = int_to_ptr.vmem [resolvable:$true] %s366
      %369 = dma.vmem_to_hbm [thread:$0]  %s367, 16, %s6, [#allocation8]
    $region53: #{tpu_custom_call.1} parent=1 // pred_fallthru
      _
    // Predicated region
    $region54: #{tpu_custom_call.1} parent=1 // pred_check
      _
    $region55: #{tpu_custom_call.1} parent=1 // pred_check_branch
      %371 = sbr.rel (0) target = $region57
    $region56: #{tpu_custom_call.1} parent=1 // pred_region
      %372 = dma.done [#allocation8], 16
    $region57: #{tpu_custom_call.1} parent=1 // pred_fallthru
      _
    %373 = vsyncpa [#allocation7], 1
    %374 = vsyncpa [#allocation10], 1
    %375 = vsyncpa [#allocation13], 1
    %376 = vsyncpa [#allocation8], 1

</llo_original>
